<compile_context>
chip_gen: v5e
topology: v5e:2x2
jax: 0.10.0
libtpu: 0.0.40
codegen_flags: <defaults>
</compile_context>

<pallas_src>
import functools

import jax
import jax.numpy as jnp
import numpy as np
from jax.experimental import pallas as pl
from jax.experimental.pallas import tpu as pltpu


def _round_up(x, m):
    return (x + m - 1) // m * m


def _sublane_multiple(dtype):
    # sublane packing: 8 rows/vreg at 32-bit, 16 at 16-bit, 32 at 8-bit
    return max(8, 32 // jnp.dtype(dtype).itemsize)


def _vmem_capacity_bytes():
    try:
        return int(pltpu.get_tpu_info().vmem_capacity_bytes)
    except Exception:
        return 64 * 1024 * 1024  # conservative default: v7x per-TensorCore VMEM


def _token_embed_kernel(seq_major, ids_ref, tok_ref, pos_ref, o_ref, gather_ref):
    # ids_ref    : SMEM (B * T_pad,) int32  -- scalar-prefetched token ids
    # tok_ref    : VMEM (V, E)              -- full vocabulary table, resident
    # pos_ref    : VMEM (tile_t, E) f32     -- positional rows for this tile (no gather)
    # o_ref      : VMEM (tile_t, E)         -- output tile
    # gather_ref : VMEM (tile_t, E)         -- scratch: gathered token rows
    seq_axis = 0 if seq_major else 1
    j = pl.program_id(seq_axis)
    b = pl.program_id(1 - seq_axis)
    tile_t = o_ref.shape[0]
    t_pad = pl.num_programs(seq_axis) * tile_t
    base = b * t_pad + j * tile_t

    def gather_row(i, carry):
        tok_id = ids_ref[base + i]                               # scalar read from SMEM
        gather_ref[pl.ds(i, 1), :] = tok_ref[pl.ds(tok_id, 1), :]  # dynamic row gather
        return carry

    jax.lax.fori_loop(0, tile_t, gather_row, 0)

    # One dense vectorized add over the whole tile, in f32 (pos stays f32).
    o_ref[...] = (gather_ref[...].astype(jnp.float32) + pos_ref[...]).astype(o_ref.dtype)


def token_embedding(x, tok_table, pos_table, *, tile_t=512):
    """x: (B, T) int token ids; tok_table: (V, E); pos_table: (max_len, E)."""
    B, T = x.shape
    V, E = tok_table.shape
    max_len = pos_table.shape[0]
    assert T <= max_len, f"sequence length {T} exceeds max_len {max_len}"

    out_dtype = jnp.promote_types(tok_table.dtype, pos_table.dtype)

    # Generation-aware VMEM budgeting.
    vmem_cap = _vmem_capacity_bytes()
    vmem_limit = max(32 * 1024 * 1024, vmem_cap - 16 * 1024 * 1024)     # scoped limit w/ headroom
    table_gate = max(8 * 1024 * 1024, vmem_cap // 2 - 8 * 1024 * 1024)  # ~24 MiB v7x, ~56 MiB v5e/v6e

    table_bytes = V * E * jnp.dtype(tok_table.dtype).itemsize
    if table_bytes > table_gate:
        # TODO(synk): large-vocab path: per-row DMA gather from HBM driven by prefetched ids.
        raise NotImplementedError("vocabulary table too large for resident-VMEM path")

    # dtype-aware sublane rounding for the (tile_t, E) blocks.
    sub = max(_sublane_multiple(tok_table.dtype), _sublane_multiple(out_dtype), 8)
    tile_t = min(tile_t, _round_up(T, sub))
    # Shrink tile_t if pipeline buffers (2x pos + 2x out + gather scratch) would not fit
    # beside the resident table under the VMEM limit.
    per_row_bytes = 5 * E * 4
    budget = vmem_limit - table_bytes - 4 * 1024 * 1024
    max_rows = max(sub, (budget // per_row_bytes) // sub * sub)
    tile_t = max(sub, min(_round_up(tile_t, sub), max_rows))
    t_pad = _round_up(T, tile_t)
    n_t = t_pad // tile_t

    # Clamp ids (guards the gather; nn.Embedding would error on OOB ids) and pad the
    # sequence axis to a tile multiple.  Padded rows are sliced off at the end.
    ids = jnp.clip(x.astype(jnp.int32), 0, V - 1)
    if t_pad > T:
        ids = jnp.pad(ids, ((0, 0), (0, t_pad - T)))
    ids_flat = ids.reshape(B * t_pad)  # scalar-prefetch operand (lives in SMEM)

    # Positional rows stay f32 until the in-kernel add.
    pos = pos_table[:T].astype(jnp.float32)
    if t_pad > T:
        pos = jnp.pad(pos, ((0, t_pad - T), (0, 0)))

    # Lead with the axis that has more parallel work (helps v7x's 2 TensorCores; neutral v5e/v6e).
    seq_major = n_t >= B
    if seq_major:
        grid = (n_t, B)
        tok_map = lambda j, b, ids: (0, 0)
        pos_map = lambda j, b, ids: (j, 0)
        out_map = lambda j, b, ids: (b, j, 0)
    else:
        grid = (B, n_t)
        tok_map = lambda b, j, ids: (0, 0)
        pos_map = lambda b, j, ids: (j, 0)
        out_map = lambda b, j, ids: (b, j, 0)

    def _call(table_spec):
        grid_spec = pltpu.PrefetchScalarGridSpec(
            num_scalar_prefetch=1,
            grid=grid,
            in_specs=[
                table_spec,                               # full vocab table, resident
                pl.BlockSpec((tile_t, E), pos_map),       # positional rows for this tile
            ],
            out_specs=pl.BlockSpec((None, tile_t, E), out_map),
            scratch_shapes=[pltpu.VMEM((tile_t, E), tok_table.dtype)],
        )
        return pl.pallas_call(
            functools.partial(_token_embed_kernel, seq_major),
            grid_spec=grid_spec,
            out_shape=jax.ShapeDtypeStruct((B, t_pad, E), out_dtype),
            compiler_params=pltpu.CompilerParams(
                dimension_semantics=("parallel", "parallel"),
                vmem_limit_bytes=int(vmem_limit),
            ),
        )(ids_flat, tok_table, pos)

    try:
        # Single-buffer the resident table: constant index_map -> second buffer is dead VMEM.
        out = _call(pl.BlockSpec((V, E), tok_map, pipeline_mode=pl.Buffered(1)))
    except Exception:
        # Fall back to the default (double-buffered) table spec if Buffered(1) is unavailable.
        out = _call(pl.BlockSpec((V, E), tok_map))

    return out[:, :T, :]


def make_sinusoidal_pos_emb(max_len, embedding_size):
    pos = jnp.arange(max_len, dtype=jnp.float32)[:, None]            # (max_len, 1)
    _2i = jnp.arange(0, embedding_size, 2, dtype=jnp.float32)        # (E/2,)
    div = jnp.power(10000.0, _2i / embedding_size)                   # (E/2,)
    pe = jnp.zeros((max_len, embedding_size), dtype=jnp.float32)
    pe = pe.at[:, 0::2].set(jnp.sin(pos / div))
    pe = pe.at[:, 1::2].set(jnp.cos(pos / div))
    return pe


if __name__ == "__main__":
    vocab_size = 50
    embedding_size = 32
    max_len = 16
    B, T = 2, 8

    key = jax.random.PRNGKey(0)
    k_tok, k_ids = jax.random.split(key)

    # nn.Embedding default init ~ N(0, 1)
    tok_table = jax.random.normal(k_tok, (vocab_size, embedding_size), dtype=jnp.float32)
    pos_table = make_sinusoidal_pos_emb(max_len, embedding_size)

    x = jax.random.randint(k_ids, (B, T), 0, vocab_size, dtype=jnp.int32)

    out = token_embedding(x, tok_table, pos_table)
    out = jax.block_until_ready(out)

    # pure-JAX reference
    ref = tok_table[x] + pos_table[:T, :]
    np.testing.assert_allclose(np.asarray(out), np.asarray(ref), rtol=1e-6, atol=1e-6)

    print("KERNEL_OK")
</pallas_src>

<mosaic_0001>
module attributes {stable_mosaic.version = 11 : i64} {
  func.func @_token_embed_kernel(%arg0: i32, %arg1: i32, %arg2: memref<16xi32, #tpu.memory_space<smem>>, %arg3: memref<50x32xf32, #tpu.memory_space<vmem>>, %arg4: memref<8x32xf32, #tpu.memory_space<vmem>>, %arg5: memref<1x8x32xf32, #tpu.memory_space<vmem>>, %arg6: memref<8x32xf32, #tpu.memory_space<vmem>>) attributes {dimension_semantics = [#tpu.dimension_semantics<parallel>, #tpu.dimension_semantics<parallel>], iteration_bounds = array<i64: 2, 1>, scalar_prefetch = 1 : i64, scratch_operands = 1 : i64, tpu.core_type = #tpu.core_type<tc>, window_params = [{pipeline_mode = #tpu.pipeline_mode<synchronous>, transform_indices = @transform_0, window_bounds = array<i64: 50, 32>}, {transform_indices = @transform_1, window_bounds = array<i64: 8, 32>}, {transform_indices = @transform_2, window_bounds = array<i64: 1, 8, 32>}]} {
    %c8_i32 = arith.constant 8 : i32
    %0 = arith.muli %arg0, %c8_i32 : i32
    %c8_i32_0 = arith.constant 8 : i32
    %1 = arith.muli %arg1, %c8_i32_0 : i32
    %2 = arith.addi %0, %1 : i32
    %c0_i32 = arith.constant 0 : i32
    %c8_i32_1 = arith.constant 8 : i32
    %3 = arith.addi %c0_i32, %c8_i32_1 : i32
    %c1_i32 = arith.constant 1 : i32
    scf.for %arg7 = %c0_i32 to %3 step %c1_i32  : i32 {
      %10 = arith.addi %2, %arg7 : i32
      %11 = arith.index_cast %10 : i32 to index
      %12 = memref.load %arg2[%11] : memref<16xi32, #tpu.memory_space<smem>>
      %13 = arith.index_cast %12 : i32 to index
      %c0_9 = arith.constant 0 : index
      %14 = vector.load %arg3[%13, %c0_9] : memref<50x32xf32, #tpu.memory_space<vmem>>, vector<1x32xf32>
      %15 = arith.index_cast %arg7 : i32 to index
      %c0_10 = arith.constant 0 : index
      %16 = vector.load %arg6[%15, %c0_10] : memref<8x32xf32, #tpu.memory_space<vmem>>, vector<1x32xf32>
      tpu.vector_store %arg6[%15, %c0_10], %14 {strides = array<i32>} : memref<8x32xf32, #tpu.memory_space<vmem>>, vector<1x32xf32>,
    }
    %c8_i32_2 = arith.constant 8 : i32
    %c0 = arith.constant 0 : index
    %c0_3 = arith.constant 0 : index
    %4 = vector.load %arg6[%c0, %c0_3] : memref<8x32xf32, #tpu.memory_space<vmem>>, vector<8x32xf32>
    %c0_4 = arith.constant 0 : index
    %c0_5 = arith.constant 0 : index
    %5 = vector.load %arg4[%c0_4, %c0_5] : memref<8x32xf32, #tpu.memory_space<vmem>>, vector<8x32xf32>
    %6 = arith.addf %4, %5 : vector<8x32xf32>
    %c0_6 = arith.constant 0 : index
    %c0_7 = arith.constant 0 : index
    %c0_8 = arith.constant 0 : index
    %7 = vector.load %arg5[%c0_6, %c0_7, %c0_8] : memref<1x8x32xf32, #tpu.memory_space<vmem>>, vector<1x8x32xf32>
    %8 = vector.shape_cast %7 : vector<1x8x32xf32> to vector<8x32xf32>
    %9 = vector.shape_cast %6 : vector<8x32xf32> to vector<1x8x32xf32>
    tpu.vector_store %arg5[%c0_6, %c0_7, %c0_8], %9 {strides = array<i32>} : memref<1x8x32xf32, #tpu.memory_space<vmem>>, vector<1x8x32xf32>,
    return
  }
  func.func @transform_0(%arg0: i32, %arg1: i32, %arg2: memref<16xi32, #tpu.memory_space<smem>>) -> (i32, i32) {
    %c0_i32 = arith.constant 0 : i32
    %c0_i32_0 = arith.constant 0 : i32
    %c0_i32_1 = arith.constant 0 : i32
    return %c0_i32, %c0_i32_0 : i32, i32
  }
  func.func @transform_1(%arg0: i32, %arg1: i32, %arg2: memref<16xi32, #tpu.memory_space<smem>>) -> (i32, i32) {
    %c0_i32 = arith.constant 0 : i32
    %c0_i32_0 = arith.constant 0 : i32
    return %arg1, %c0_i32 : i32, i32
  }
  func.func @transform_2(%arg0: i32, %arg1: i32, %arg2: memref<16xi32, #tpu.memory_space<smem>>) -> (i32, i32, i32) {
    %c0_i32 = arith.constant 0 : i32
    %c0_i32_0 = arith.constant 0 : i32
    return %arg0, %arg1, %c0_i32 : i32, i32, i32
  }
}

module attributes {stable_mosaic.version = 11 : i64} {
  func.func @_token_embed_kernel(%arg0: i32, %arg1: i32, %arg2: memref<16xi32, #tpu.memory_space<smem>>, %arg3: memref<50x32xf32, #tpu.memory_space<vmem>>, %arg4: memref<8x32xf32, #tpu.memory_space<vmem>>, %arg5: memref<1x8x32xf32, #tpu.memory_space<vmem>>, %arg6: memref<8x32xf32, #tpu.memory_space<vmem>>) attributes {dimension_semantics = [#tpu.dimension_semantics<parallel>, #tpu.dimension_semantics<parallel>], iteration_bounds = array<i64: 2, 1>, scalar_prefetch = 1 : i64, scratch_operands = 1 : i64, tpu.core_type = #tpu.core_type<tc>, window_params = [{pipeline_mode = #tpu.pipeline_mode<synchronous>, transform_indices = @transform_0, window_bounds = array<i64: 50, 32>}, {transform_indices = @transform_1, window_bounds = array<i64: 8, 32>}, {transform_indices = @transform_2, window_bounds = array<i64: 1, 8, 32>}]} {
    %c8_i32 = arith.constant 8 : i32
    %0 = arith.muli %arg0, %c8_i32 : i32
    %c8_i32_0 = arith.constant 8 : i32
    %1 = arith.muli %arg1, %c8_i32_0 : i32
    %2 = arith.addi %0, %1 : i32
    %c0_i32 = arith.constant 0 : i32
    %c8_i32_1 = arith.constant 8 : i32
    %3 = arith.addi %c0_i32, %c8_i32_1 : i32
    %c1_i32 = arith.constant 1 : i32
    scf.for %arg7 = %c0_i32 to %3 step %c1_i32  : i32 {
      %10 = arith.addi %2, %arg7 : i32
      %11 = arith.index_cast %10 : i32 to index
      %12 = memref.load %arg2[%11] : memref<16xi32, #tpu.memory_space<smem>>
      %13 = arith.index_cast %12 : i32 to index
      %c0_9 = arith.constant 0 : index
      %14 = vector.load %arg3[%13, %c0_9] : memref<50x32xf32, #tpu.memory_space<vmem>>, vector<1x32xf32>
      %15 = arith.index_cast %arg7 : i32 to index
      %c0_10 = arith.constant 0 : index
      %16 = vector.load %arg6[%15, %c0_10] : memref<8x32xf32, #tpu.memory_space<vmem>>, vector<1x32xf32>
      tpu.vector_store %arg6[%15, %c0_10], %14 {strides = array<i32>} : memref<8x32xf32, #tpu.memory_space<vmem>>, vector<1x32xf32>,
    }
    %c8_i32_2 = arith.constant 8 : i32
    %c0 = arith.constant 0 : index
    %c0_3 = arith.constant 0 : index
    %4 = vector.load %arg6[%c0, %c0_3] : memref<8x32xf32, #tpu.memory_space<vmem>>, vector<8x32xf32>
    %c0_4 = arith.constant 0 : index
    %c0_5 = arith.constant 0 : index
    %5 = vector.load %arg4[%c0_4, %c0_5] : memref<8x32xf32, #tpu.memory_space<vmem>>, vector<8x32xf32>
    %6 = arith.addf %4, %5 : vector<8x32xf32>
    %c0_6 = arith.constant 0 : index
    %c0_7 = arith.constant 0 : index
    %c0_8 = arith.constant 0 : index
    %7 = vector.load %arg5[%c0_6, %c0_7, %c0_8] : memref<1x8x32xf32, #tpu.memory_space<vmem>>, vector<1x8x32xf32>
    %8 = vector.shape_cast %7 : vector<1x8x32xf32> to vector<8x32xf32>
    %9 = vector.shape_cast %6 : vector<8x32xf32> to vector<1x8x32xf32>
    tpu.vector_store %arg5[%c0_6, %c0_7, %c0_8], %9 {strides = array<i32>} : memref<1x8x32xf32, #tpu.memory_space<vmem>>, vector<1x8x32xf32>,
    return
  }
  func.func @transform_0(%arg0: i32, %arg1: i32, %arg2: memref<16xi32, #tpu.memory_space<smem>>) -> (i32, i32) {
    %c0_i32 = arith.constant 0 : i32
    %c0_i32_0 = arith.constant 0 : i32
    %c0_i32_1 = arith.constant 0 : i32
    return %c0_i32, %c0_i32_0 : i32, i32
  }
  func.func @transform_1(%arg0: i32, %arg1: i32, %arg2: memref<16xi32, #tpu.memory_space<smem>>) -> (i32, i32) {
    %c0_i32 = arith.constant 0 : i32
    %c0_i32_0 = arith.constant 0 : i32
    return %arg1, %c0_i32 : i32, i32
  }
  func.func @transform_2(%arg0: i32, %arg1: i32, %arg2: memref<16xi32, #tpu.memory_space<smem>>) -> (i32, i32, i32) {
    %c0_i32 = arith.constant 0 : i32
    %c0_i32_0 = arith.constant 0 : i32
    return %arg0, %arg1, %c0_i32 : i32, i32, i32
  }
}

</mosaic_0001>

<llo_original>
// kernel: tpu_custom_call.1
$region0: #{tpu_custom_call.1}
  #allocation0 [shape = 'u32[]', space=smem, size = 0x4, offset = 0x4, fixed_abs, tag = 'smem constant byte address 0x4 - core index']
  #allocation1 [shape = 'u32[72,128]{1,0:T(1,128)}', space=vmem, size = 0x9000, scoped, tag = 'internal scratch']
  #allocation2 [shape = 'f32[8,32]{1,0:T(8,128)}', space=vmem, size = 0x1000, scoped, tag = 'scratch operand']
  #allocation3 [shape = 's32[1]{0}', space=sflag, size = 0x4, scoped, tag = 'scoped memory for tpu_custom_call.1']
  #allocation4 [shape = 'u8[512]{0}', space=smem, size = 0x200, scoped, tag = 'prefetched SMEM operand 0']
  %s0 = inlined_call_operand.vmem [shape: s32[16], index: 0, kind: input, shape index: {}]
  %s1 = inlined_call_operand.vmem [shape: f32[50,32], index: 1, kind: input, shape index: {}]
  %s2 = inlined_call_operand.vmem [shape: f32[8,32], index: 2, kind: input, shape index: {}]
  %s3 = inlined_call_operand.hbm [shape: f32[2,8,32], index: 3, kind: output, shape index: {}]
  %s4 = sld [smem:[#allocation0]]
  $region48: #{tpu_custom_call.1} parent=0
    _
  %s6 = ssub.s32 1, %s4
  %s7 = scalar_select 0, %s6, %s4
  %s9 = sshll.u32 %s0, 4
  %s10 = int_to_ptr.vmem [resolvable:$true] %s9
  %12 = dma.vmem_to_smem %s10, 16, [#allocation4], [#allocation3]
  %14 = dma.done [#allocation3], 16
  %15 = sfence
  $region1: #{tpu_custom_call.1} parent=0
    #allocation5 [shape = 'u8[8192]{0}', space=vmem, size = 0x2000, scoped, tag = 'output window, operand 0']
    #allocation6 [shape = 's32[2]{0}', space=sflag, size = 0x8, scoped, tag = 'scoped memory for tpu_custom_call.1']
    %16 = vsyncpa [#allocation6], 0
    %s17 = scalar_lea.sflag [#allocation6], 1
    %18 = vsyncpa %s17, 0
    loop: start=0, step=1, limit=4
    $region2: #{tpu_custom_call.1} parent=1 // loop_pre_header
      _
    $region3: #{tpu_custom_call.1} parent=1 // loop_header
      %s20 = sphi 0, %s24
      %p21 = scmp.ge.s32.totalorder %s20, 4
      %s27 = sphi 0, %s39
      %s28 = sphi 0, %s35
      %s29 = sphi 0, %s27
      %s30 = sphi 0, %s28
      %s31 = sphi 0, %s29
      %s32 = sphi 0, %s30
      %s40 = sphi 0, %s40
      %s42 = sphi 0, %s40
      %s43 = sphi 0, %s42
      %s57 = sphi 0, %s43
      %s63 = sphi 0, %s65
      %s66 = sphi 0, %s63
      %s67 = sphi 0, %s66
      %s83 = sphi 0, %s67
      %s91 = sphi 0, %s93
      %s94 = sphi 0, %s91
      %s95 = sphi 0, %s94
      %s111 = sphi 0, %s95
    $region4: #{tpu_custom_call.1} parent=1 // loop_header_branch
      %23 = sbr.rel (%p21) target = $region8
    $region5: #{tpu_custom_call.1} parent=1 // loop_body
      %s25 = ssub.s32 %s20, 1
      %s26 = ssub.s32 %s20, 2
      %s33 = sadd.s32 1, %s28
      %p34 = scmp.ge.s32.totalorder %s33, 1
      %s35 = scalar_select %p34, 0, %s33
      %s36 = sadd.s32 1, %s27
      %s37 = scalar_select %p34, %s36, %s27
      %p38 = scmp.ge.s32.totalorder %s37, 2
      %s39 = scalar_select %p38, 0, %s37
      %s41 = sadd.s32 %s40, 1
      %p44 = scmp.eq.s32.totalorder %s20, 1
      %p45 = scmp.ne.s32.totalorder %s40, %s42
      %p46 = scmp.eq.s32.totalorder %s20, 0
      %p47 = por %p45, %p46
      %p48 = scmp.ne.s32.totalorder %s40, %s42
      %p49 = scmp.eq.s32.totalorder %s25, 1
      %p50 = por %p48, %p49
      %p51 = scmp.ne.s32.totalorder %s42, %s43
      %p52 = scmp.eq.s32.totalorder %s25, 0
      %p53 = por %p51, %p52
      %p54 = scmp.ne.s32.totalorder %s42, %s43
      %p55 = scmp.eq.s32.totalorder %s26, 1
      %p56 = por %p54, %p55
      %p58 = scmp.ne.s32.totalorder %s43, %s57
      %p59 = scmp.eq.s32.totalorder %s26, 0
      %p60 = por %p58, %p59
      %s61 = ssub.s32 %s28, %s35
      %p62 = scmp.eq.s32.totalorder %s61, 0
      %s64 = sadd.s32 %s63, 1
      %s65 = scalar_select %p62, %s63, %s64
      %p68 = pneg %p62
      %p69 = scmp.eq.s32.totalorder %s20, 1
      %p70 = por %p68, %p69
      %p71 = scmp.ne.s32.totalorder %s63, %s66
      %p72 = scmp.eq.s32.totalorder %s20, 0
      %p73 = por %p71, %p72
      %p74 = scmp.ne.s32.totalorder %s63, %s66
      %p75 = scmp.eq.s32.totalorder %s25, 1
      %p76 = por %p74, %p75
      %p77 = scmp.ne.s32.totalorder %s66, %s67
      %p78 = scmp.eq.s32.totalorder %s25, 0
      %p79 = por %p77, %p78
      %p80 = scmp.ne.s32.totalorder %s66, %s67
      %p81 = scmp.eq.s32.totalorder %s26, 1
      %p82 = por %p80, %p81
      %p84 = scmp.ne.s32.totalorder %s67, %s83
      %p85 = scmp.eq.s32.totalorder %s26, 0
      %p86 = por %p84, %p85
      %s87 = ssub.s32 %s27, %s39
      %s88 = ssub.s32 %s28, %s35
      %s89 = sor.u32 %s87, %s88
      %p90 = scmp.eq.s32.totalorder %s89, 0
      %s92 = sadd.s32 %s91, 1
      %s93 = scalar_select %p90, %s91, %s92
      %p96 = pneg %p90
      %p97 = scmp.eq.s32.totalorder %s20, 1
      %p98 = por %p96, %p97
      %p99 = scmp.ne.s32.totalorder %s91, %s94
      %p100 = scmp.eq.s32.totalorder %s20, 0
      %p101 = por %p99, %p100
      %p102 = scmp.ne.s32.totalorder %s91, %s94
      %p103 = scmp.eq.s32.totalorder %s25, 1
      %p104 = por %p102, %p103
      %p105 = scmp.ne.s32.totalorder %s94, %s95
      %p106 = scmp.eq.s32.totalorder %s25, 0
      %p107 = por %p105, %p106
      %p108 = scmp.ne.s32.totalorder %s94, %s95
      %p109 = scmp.eq.s32.totalorder %s26, 1
      %p110 = por %p108, %p109
      %p112 = scmp.ne.s32.totalorder %s95, %s111
      %p113 = scmp.eq.s32.totalorder %s26, 0
      %p114 = por %p112, %p113
      %p115 = scmp.le.s32.totalorder 1, %s20
      %p116 = scmp.lt.s32.totalorder %s20, 3
      %p117 = pnand %p115, %p116
      %p118 = pneg %p117
      // Predicated region
      $region9: #{tpu_custom_call.1} parent=5 // pred_check
        _
      $region10: #{tpu_custom_call.1} parent=5 // pred_check_branch
        %120 = sbr.rel (%p117) target = $region12
      $region11: #{tpu_custom_call.1} parent=5 // pred_region
        %s121 = ssub.s32 %s20, 1
        // Predicated region
        $region13: #{tpu_custom_call.1} parent=11 // pred_check
          %p122 = pneg %p53
        $region14: #{tpu_custom_call.1} parent=11 // pred_check_branch
          %124 = sbr.rel (%p122) target = $region16
        $region15: #{tpu_custom_call.1} parent=11 // pred_region
          _
        $region16: #{tpu_custom_call.1} parent=11 // pred_fallthru
          _
        // Predicated region
        $region17: #{tpu_custom_call.1} parent=11 // pred_check
          %p125 = pneg %p79
        $region18: #{tpu_custom_call.1} parent=11 // pred_check_branch
          %127 = sbr.rel (%p125) target = $region20
        $region19: #{tpu_custom_call.1} parent=11 // pred_region
          %p128 = scmp.lt.s32.totalorder %s30, 0
          %s129 = scalar_select %p128, %s30, 0
          %s130 = smul.addr %s129, 8
          %s131 = scalar_lea.vmem %s2, %s130
        $region20: #{tpu_custom_call.1} parent=11 // pred_fallthru
          _
      $region12: #{tpu_custom_call.1} parent=5 // pred_fallthru
        _
      %p132 = scmp.lt.s32.totalorder %s20, 2
      // Predicated region
      $region21: #{tpu_custom_call.1} parent=5 // pred_check
        %p133 = pneg %p132
      $region22: #{tpu_custom_call.1} parent=5 // pred_check_branch
        %135 = sbr.rel (%p133) target = $region24
      $region23: #{tpu_custom_call.1} parent=5 // pred_region
        _
      $region24: #{tpu_custom_call.1} parent=5 // pred_fallthru
        _
      %p136 = scmp.le.s32.totalorder 1, %s20
      %p137 = scmp.lt.s32.totalorder %s20, 3
      %p138 = pnand %p136, %p137
      %p139 = pneg %p138
      // Predicated region
      $region25: #{tpu_custom_call.1} parent=5 // pred_check
        _
      $region26: #{tpu_custom_call.1} parent=5 // pred_check_branch
        %141 = sbr.rel (%p138) target = $region28
      $region27: #{tpu_custom_call.1} parent=5 // pred_region
        %s142 = ssub.s32 %s20, 1
        %p143 = pneg %p53
        %p144 = pneg %p50
        %p145 = scmp.lt.s32.totalorder %s30, 0
        %s146 = scalar_select %p145, %s30, 0
        %s147 = smul.addr %s146, 8
        %s148 = scalar_lea.vmem %s2, %s147
        %p149 = pneg %p79
        %p150 = pneg %p76
        %p151 = pneg %p107
        %p152 = pneg %p104
        %s153 = sand.u32 %s94, 1
        %s154 = scalar_lea.sflag [#allocation6], %s153
        %s155 = sand.u32 %s94, 1
        %s156 = smul.addr %s155, 8
        %s157 = scalar_lea.vmem [#allocation5], %s156
        %p158 = scmp.lt.s32.totalorder %s30, 0
        %s159 = scalar_select %p158, %s30, 0
        %s160 = smul.addr %s159, 8
        %s161 = scalar_lea.vmem %s2, %s160
        %s162 = smul.u32 %s29, 8
        %s163 = smul.u32 %s30, 8
        %s164 = sadd.s32 %s162, %s163
        loop: start=0, step=1, limit=8
        $region29: #{tpu_custom_call.1} parent=27 // loop_pre_header
          _
        $region30: #{tpu_custom_call.1} parent=27 // loop_header
          %s166 = sphi 0, %s170
          %p167 = scmp.ge.s32.totalorder %s166, 8
        $region31: #{tpu_custom_call.1} parent=27 // loop_header_branch
          %169 = sbr.rel (%p167) target = $region35
        $region32: #{tpu_custom_call.1} parent=27 // loop_body
          %s171 = sadd.s32 %s164, %s166
          %s172 = sld [smem:[#allocation4 + %s171]]
          %s173 = scalar_lea.vmem %s1, %s172
          %v174 = vld [vmem:[%s173] sm:$0x1]
          %s175 = scalar_lea.vmem [#allocation2], %s166
          %vm176 = vcmask 253952
          %177 = vst.msk [vmem:[%s175] sm:$0x1] %vm176, %v174
        $region33: #{tpu_custom_call.1} parent=27 // loop_footer
          %s170 = sadd.s32 1, %s166
        $region34: #{tpu_custom_call.1} parent=27 // loop_footer_branch
          %165 = sbr.rel target = $region30
        $region35: #{tpu_custom_call.1} parent=27 // loop_exit
          _
        %v178 = vld [vmem:[#allocation2] sm:$0xff]
        %v179 = vld [vmem:[%s161] sm:$0xff]
        %v180 = vadd.f32 %v178, %v179
        %vm181 = vcmask 261120
        %182 = vst.msk [vmem:[%s157] sm:$0xff] %vm181, %v180
        %s183 = sand.u32 %s94, 1
        %s184 = scalar_lea.sflag [#allocation6], %s183
        %s185 = sand.u32 %s94, 1
        %s186 = smul.addr %s185, 8
        %s187 = scalar_lea.vmem [#allocation5], %s186
        // Predicated region
        $region36: #{tpu_custom_call.1} parent=27 // pred_check
          %p188 = pneg %p104
        $region37: #{tpu_custom_call.1} parent=27 // pred_check_branch
          %190 = sbr.rel (%p188) target = $region39
        $region38: #{tpu_custom_call.1} parent=27 // pred_region
          %192 = vsyncadd %s184, 0
          %s193 = sadd.s32 %s30, %s29
          %s194 = smul.addr %s193, 8
          %s195 = scalar_lea.hbm %s3, %s194
          %s197 = sshll.u32 %s187, 4
          %s198 = int_to_ptr.vmem [resolvable:$true] %s197
          %s199 = sshll.u32 %s195, 4
          %s200 = int_to_ptr.hbm [resolvable:$true] %s199
          %202 = dma.vmem_to_hbm [thread:$0]  %s198, 128, %s200, %s184
        $region39: #{tpu_custom_call.1} parent=27 // pred_fallthru
          _
      $region28: #{tpu_custom_call.1} parent=5 // pred_fallthru
        _
      %p203 = scmp.le.s32.totalorder 2, %s20
      // Predicated region
      $region40: #{tpu_custom_call.1} parent=5 // pred_check
        %p204 = pneg %p203
      $region41: #{tpu_custom_call.1} parent=5 // pred_check_branch
        %206 = sbr.rel (%p204) target = $region43
      $region42: #{tpu_custom_call.1} parent=5 // pred_region
        %s207 = ssub.s32 %s20, 2
        // Predicated region
        $region44: #{tpu_custom_call.1} parent=42 // pred_check
          %p208 = pneg %p110
        $region45: #{tpu_custom_call.1} parent=42 // pred_check_branch
          %210 = sbr.rel (%p208) target = $region47
        $region46: #{tpu_custom_call.1} parent=42 // pred_region
          %s211 = sand.u32 %s95, 1
          %s212 = scalar_lea.sflag [#allocation6], %s211
          %s213 = sand.u32 %s95, 1
          %s214 = smul.addr %s213, 8
          %s215 = scalar_lea.vmem [#allocation5], %s214
          %217 = dma.done %s212, 128
        $region47: #{tpu_custom_call.1} parent=42 // pred_fallthru
          _
      $region43: #{tpu_custom_call.1} parent=5 // pred_fallthru
        _
    $region6: #{tpu_custom_call.1} parent=1 // loop_footer
      %s24 = sadd.s32 1, %s20
    $region7: #{tpu_custom_call.1} parent=1 // loop_footer_branch
      %19 = sbr.rel target = $region3
    $region8: #{tpu_custom_call.1} parent=1 // loop_exit
      _
    %218 = vsyncpa [#allocation6], 1
    %s219 = scalar_lea.sflag [#allocation6], 1
    %220 = vsyncpa %s219, 1

// kernel: tpu_custom_call.1
$region0: #{tpu_custom_call.1}
  #allocation0 [shape = 'u32[]', space=smem, size = 0x4, offset = 0x4, fixed_abs, tag = 'smem constant byte address 0x4 - core index']
  #allocation1 [shape = 'u32[72,128]{1,0:T(1,128)}', space=vmem, size = 0x9000, scoped, tag = 'internal scratch']
  #allocation2 [shape = 'f32[8,32]{1,0:T(8,128)}', space=vmem, size = 0x1000, scoped, tag = 'scratch operand']
  #allocation3 [shape = 's32[1]{0}', space=sflag, size = 0x4, scoped, tag = 'scoped memory for tpu_custom_call.1']
  #allocation4 [shape = 'u8[512]{0}', space=smem, size = 0x200, scoped, tag = 'prefetched SMEM operand 0']
  %s0 = inlined_call_operand.vmem [shape: s32[16], index: 0, kind: input, shape index: {}]
  %s1 = inlined_call_operand.vmem [shape: f32[50,32], index: 1, kind: input, shape index: {}]
  %s2 = inlined_call_operand.vmem [shape: f32[8,32], index: 2, kind: input, shape index: {}]
  %s3 = inlined_call_operand.hbm [shape: f32[2,8,32], index: 3, kind: output, shape index: {}]
  %s4 = sld [smem:[#allocation0]]
  $region48: #{tpu_custom_call.1} parent=0
    _
  %s6 = ssub.s32 1, %s4
  %s7 = scalar_select 0, %s6, %s4
  %s9 = sshll.u32 %s0, 4
  %s10 = int_to_ptr.vmem [resolvable:$true] %s9
  %12 = dma.vmem_to_smem %s10, 16, [#allocation4], [#allocation3]
  %14 = dma.done [#allocation3], 16
  %15 = sfence
  $region1: #{tpu_custom_call.1} parent=0
    #allocation5 [shape = 'u8[8192]{0}', space=vmem, size = 0x2000, scoped, tag = 'output window, operand 0']
    #allocation6 [shape = 's32[2]{0}', space=sflag, size = 0x8, scoped, tag = 'scoped memory for tpu_custom_call.1']
    %16 = vsyncpa [#allocation6], 0
    %s17 = scalar_lea.sflag [#allocation6], 1
    %18 = vsyncpa %s17, 0
    loop: start=0, step=1, limit=4
    $region2: #{tpu_custom_call.1} parent=1 // loop_pre_header
      _
    $region3: #{tpu_custom_call.1} parent=1 // loop_header
      %s20 = sphi 0, %s24
      %p21 = scmp.ge.s32.totalorder %s20, 4
      %s27 = sphi 0, %s39
      %s28 = sphi 0, %s35
      %s29 = sphi 0, %s27
      %s30 = sphi 0, %s28
      %s31 = sphi 0, %s29
      %s32 = sphi 0, %s30
      %s40 = sphi 0, %s40
      %s42 = sphi 0, %s40
      %s43 = sphi 0, %s42
      %s57 = sphi 0, %s43
      %s63 = sphi 0, %s65
      %s66 = sphi 0, %s63
      %s67 = sphi 0, %s66
      %s83 = sphi 0, %s67
      %s91 = sphi 0, %s93
      %s94 = sphi 0, %s91
      %s95 = sphi 0, %s94
      %s111 = sphi 0, %s95
    $region4: #{tpu_custom_call.1} parent=1 // loop_header_branch
      %23 = sbr.rel (%p21) target = $region8
    $region5: #{tpu_custom_call.1} parent=1 // loop_body
      %s25 = ssub.s32 %s20, 1
      %s26 = ssub.s32 %s20, 2
      %s33 = sadd.s32 1, %s28
      %p34 = scmp.ge.s32.totalorder %s33, 1
      %s35 = scalar_select %p34, 0, %s33
      %s36 = sadd.s32 1, %s27
      %s37 = scalar_select %p34, %s36, %s27
      %p38 = scmp.ge.s32.totalorder %s37, 2
      %s39 = scalar_select %p38, 0, %s37
      %s41 = sadd.s32 %s40, 1
      %p44 = scmp.eq.s32.totalorder %s20, 1
      %p45 = scmp.ne.s32.totalorder %s40, %s42
      %p46 = scmp.eq.s32.totalorder %s20, 0
      %p47 = por %p45, %p46
      %p48 = scmp.ne.s32.totalorder %s40, %s42
      %p49 = scmp.eq.s32.totalorder %s25, 1
      %p50 = por %p48, %p49
      %p51 = scmp.ne.s32.totalorder %s42, %s43
      %p52 = scmp.eq.s32.totalorder %s25, 0
      %p53 = por %p51, %p52
      %p54 = scmp.ne.s32.totalorder %s42, %s43
      %p55 = scmp.eq.s32.totalorder %s26, 1
      %p56 = por %p54, %p55
      %p58 = scmp.ne.s32.totalorder %s43, %s57
      %p59 = scmp.eq.s32.totalorder %s26, 0
      %p60 = por %p58, %p59
      %s61 = ssub.s32 %s28, %s35
      %p62 = scmp.eq.s32.totalorder %s61, 0
      %s64 = sadd.s32 %s63, 1
      %s65 = scalar_select %p62, %s63, %s64
      %p68 = pneg %p62
      %p69 = scmp.eq.s32.totalorder %s20, 1
      %p70 = por %p68, %p69
      %p71 = scmp.ne.s32.totalorder %s63, %s66
      %p72 = scmp.eq.s32.totalorder %s20, 0
      %p73 = por %p71, %p72
      %p74 = scmp.ne.s32.totalorder %s63, %s66
      %p75 = scmp.eq.s32.totalorder %s25, 1
      %p76 = por %p74, %p75
      %p77 = scmp.ne.s32.totalorder %s66, %s67
      %p78 = scmp.eq.s32.totalorder %s25, 0
      %p79 = por %p77, %p78
      %p80 = scmp.ne.s32.totalorder %s66, %s67
      %p81 = scmp.eq.s32.totalorder %s26, 1
      %p82 = por %p80, %p81
      %p84 = scmp.ne.s32.totalorder %s67, %s83
      %p85 = scmp.eq.s32.totalorder %s26, 0
      %p86 = por %p84, %p85
      %s87 = ssub.s32 %s27, %s39
      %s88 = ssub.s32 %s28, %s35
      %s89 = sor.u32 %s87, %s88
      %p90 = scmp.eq.s32.totalorder %s89, 0
      %s92 = sadd.s32 %s91, 1
      %s93 = scalar_select %p90, %s91, %s92
      %p96 = pneg %p90
      %p97 = scmp.eq.s32.totalorder %s20, 1
      %p98 = por %p96, %p97
      %p99 = scmp.ne.s32.totalorder %s91, %s94
      %p100 = scmp.eq.s32.totalorder %s20, 0
      %p101 = por %p99, %p100
      %p102 = scmp.ne.s32.totalorder %s91, %s94
      %p103 = scmp.eq.s32.totalorder %s25, 1
      %p104 = por %p102, %p103
      %p105 = scmp.ne.s32.totalorder %s94, %s95
      %p106 = scmp.eq.s32.totalorder %s25, 0
      %p107 = por %p105, %p106
      %p108 = scmp.ne.s32.totalorder %s94, %s95
      %p109 = scmp.eq.s32.totalorder %s26, 1
      %p110 = por %p108, %p109
      %p112 = scmp.ne.s32.totalorder %s95, %s111
      %p113 = scmp.eq.s32.totalorder %s26, 0
      %p114 = por %p112, %p113
      %p115 = scmp.le.s32.totalorder 1, %s20
      %p116 = scmp.lt.s32.totalorder %s20, 3
      %p117 = pnand %p115, %p116
      %p118 = pneg %p117
      // Predicated region
      $region9: #{tpu_custom_call.1} parent=5 // pred_check
        _
      $region10: #{tpu_custom_call.1} parent=5 // pred_check_branch
        %120 = sbr.rel (%p117) target = $region12
      $region11: #{tpu_custom_call.1} parent=5 // pred_region
        %s121 = ssub.s32 %s20, 1
        // Predicated region
        $region13: #{tpu_custom_call.1} parent=11 // pred_check
          %p122 = pneg %p53
        $region14: #{tpu_custom_call.1} parent=11 // pred_check_branch
          %124 = sbr.rel (%p122) target = $region16
        $region15: #{tpu_custom_call.1} parent=11 // pred_region
          _
        $region16: #{tpu_custom_call.1} parent=11 // pred_fallthru
          _
        // Predicated region
        $region17: #{tpu_custom_call.1} parent=11 // pred_check
          %p125 = pneg %p79
        $region18: #{tpu_custom_call.1} parent=11 // pred_check_branch
          %127 = sbr.rel (%p125) target = $region20
        $region19: #{tpu_custom_call.1} parent=11 // pred_region
          %p128 = scmp.lt.s32.totalorder %s30, 0
          %s129 = scalar_select %p128, %s30, 0
          %s130 = smul.addr %s129, 8
          %s131 = scalar_lea.vmem %s2, %s130
        $region20: #{tpu_custom_call.1} parent=11 // pred_fallthru
          _
      $region12: #{tpu_custom_call.1} parent=5 // pred_fallthru
        _
      %p132 = scmp.lt.s32.totalorder %s20, 2
      // Predicated region
      $region21: #{tpu_custom_call.1} parent=5 // pred_check
        %p133 = pneg %p132
      $region22: #{tpu_custom_call.1} parent=5 // pred_check_branch
        %135 = sbr.rel (%p133) target = $region24
      $region23: #{tpu_custom_call.1} parent=5 // pred_region
        _
      $region24: #{tpu_custom_call.1} parent=5 // pred_fallthru
        _
      %p136 = scmp.le.s32.totalorder 1, %s20
      %p137 = scmp.lt.s32.totalorder %s20, 3
      %p138 = pnand %p136, %p137
      %p139 = pneg %p138
      // Predicated region
      $region25: #{tpu_custom_call.1} parent=5 // pred_check
        _
      $region26: #{tpu_custom_call.1} parent=5 // pred_check_branch
        %141 = sbr.rel (%p138) target = $region28
      $region27: #{tpu_custom_call.1} parent=5 // pred_region
        %s142 = ssub.s32 %s20, 1
        %p143 = pneg %p53
        %p144 = pneg %p50
        %p145 = scmp.lt.s32.totalorder %s30, 0
        %s146 = scalar_select %p145, %s30, 0
        %s147 = smul.addr %s146, 8
        %s148 = scalar_lea.vmem %s2, %s147
        %p149 = pneg %p79
        %p150 = pneg %p76
        %p151 = pneg %p107
        %p152 = pneg %p104
        %s153 = sand.u32 %s94, 1
        %s154 = scalar_lea.sflag [#allocation6], %s153
        %s155 = sand.u32 %s94, 1
        %s156 = smul.addr %s155, 8
        %s157 = scalar_lea.vmem [#allocation5], %s156
        %p158 = scmp.lt.s32.totalorder %s30, 0
        %s159 = scalar_select %p158, %s30, 0
        %s160 = smul.addr %s159, 8
        %s161 = scalar_lea.vmem %s2, %s160
        %s162 = smul.u32 %s29, 8
        %s163 = smul.u32 %s30, 8
        %s164 = sadd.s32 %s162, %s163
        loop: start=0, step=1, limit=8
        $region29: #{tpu_custom_call.1} parent=27 // loop_pre_header
          _
        $region30: #{tpu_custom_call.1} parent=27 // loop_header
          %s166 = sphi 0, %s170
          %p167 = scmp.ge.s32.totalorder %s166, 8
        $region31: #{tpu_custom_call.1} parent=27 // loop_header_branch
          %169 = sbr.rel (%p167) target = $region35
        $region32: #{tpu_custom_call.1} parent=27 // loop_body
          %s171 = sadd.s32 %s164, %s166
          %s172 = sld [smem:[#allocation4 + %s171]]
          %s173 = scalar_lea.vmem %s1, %s172
          %v174 = vld [vmem:[%s173] sm:$0x1]
          %s175 = scalar_lea.vmem [#allocation2], %s166
          %vm176 = vcmask 253952
          %177 = vst.msk [vmem:[%s175] sm:$0x1] %vm176, %v174
        $region33: #{tpu_custom_call.1} parent=27 // loop_footer
          %s170 = sadd.s32 1, %s166
        $region34: #{tpu_custom_call.1} parent=27 // loop_footer_branch
          %165 = sbr.rel target = $region30
        $region35: #{tpu_custom_call.1} parent=27 // loop_exit
          _
        %v178 = vld [vmem:[#allocation2] sm:$0xff]
        %v179 = vld [vmem:[%s161] sm:$0xff]
        %v180 = vadd.f32 %v178, %v179
        %vm181 = vcmask 261120
        %182 = vst.msk [vmem:[%s157] sm:$0xff] %vm181, %v180
        %s183 = sand.u32 %s94, 1
        %s184 = scalar_lea.sflag [#allocation6], %s183
        %s185 = sand.u32 %s94, 1
        %s186 = smul.addr %s185, 8
        %s187 = scalar_lea.vmem [#allocation5], %s186
        // Predicated region
        $region36: #{tpu_custom_call.1} parent=27 // pred_check
          %p188 = pneg %p104
        $region37: #{tpu_custom_call.1} parent=27 // pred_check_branch
          %190 = sbr.rel (%p188) target = $region39
        $region38: #{tpu_custom_call.1} parent=27 // pred_region
          %192 = vsyncadd %s184, 0
          %s193 = sadd.s32 %s30, %s29
          %s194 = smul.addr %s193, 8
          %s195 = scalar_lea.hbm %s3, %s194
          %s197 = sshll.u32 %s187, 4
          %s198 = int_to_ptr.vmem [resolvable:$true] %s197
          %s199 = sshll.u32 %s195, 4
          %s200 = int_to_ptr.hbm [resolvable:$true] %s199
          %202 = dma.vmem_to_hbm [thread:$0]  %s198, 128, %s200, %s184
        $region39: #{tpu_custom_call.1} parent=27 // pred_fallthru
          _
      $region28: #{tpu_custom_call.1} parent=5 // pred_fallthru
        _
      %p203 = scmp.le.s32.totalorder 2, %s20
      // Predicated region
      $region40: #{tpu_custom_call.1} parent=5 // pred_check
        %p204 = pneg %p203
      $region41: #{tpu_custom_call.1} parent=5 // pred_check_branch
        %206 = sbr.rel (%p204) target = $region43
      $region42: #{tpu_custom_call.1} parent=5 // pred_region
        %s207 = ssub.s32 %s20, 2
        // Predicated region
        $region44: #{tpu_custom_call.1} parent=42 // pred_check
          %p208 = pneg %p110
        $region45: #{tpu_custom_call.1} parent=42 // pred_check_branch
          %210 = sbr.rel (%p208) target = $region47
        $region46: #{tpu_custom_call.1} parent=42 // pred_region
          %s211 = sand.u32 %s95, 1
          %s212 = scalar_lea.sflag [#allocation6], %s211
          %s213 = sand.u32 %s95, 1
          %s214 = smul.addr %s213, 8
          %s215 = scalar_lea.vmem [#allocation5], %s214
          %217 = dma.done %s212, 128
        $region47: #{tpu_custom_call.1} parent=42 // pred_fallthru
          _
      $region43: #{tpu_custom_call.1} parent=5 // pred_fallthru
        _
    $region6: #{tpu_custom_call.1} parent=1 // loop_footer
      %s24 = sadd.s32 1, %s20
    $region7: #{tpu_custom_call.1} parent=1 // loop_footer_branch
      %19 = sbr.rel target = $region3
    $region8: #{tpu_custom_call.1} parent=1 // loop_exit
      _
    %218 = vsyncpa [#allocation6], 1
    %s219 = scalar_lea.sflag [#allocation6], 1
    %220 = vsyncpa %s219, 1

</llo_original>
